<compile_context>
chip_gen: v5e
topology: v5e:2x2
jax: 0.10.0
libtpu: 0.0.40
codegen_flags: <defaults>
</compile_context>

<pallas_src>
import jax
import jax.numpy as jnp
from jax.experimental import pallas as pl
from jax.experimental.pallas import tpu as pltpu


def _relu_kernel(x_ref, o_ref):
    # Single VPU max-with-immediate per vreg; no zero-tile materialization.
    o_ref[...] = jnp.maximum(x_ref[...], 0.0)


def _ceil_to(a: int, m: int) -> int:
    return ((a + m - 1) // m) * m


def relu_pallas(x: jax.Array, grid: int = 4) -> jax.Array:
    """ReLU(x) for any shape/layout, computed by a lane-dense Pallas TPU kernel."""
    orig_shape = x.shape
    dtype = x.dtype
    n = x.size

    lanes = 128
    sublanes = 8
    # Rows needed for a (rows, 128) layout, rounded so every grid step gets a
    # block whose row count is a multiple of 8 (sublane tiling constraint).
    rows = _ceil_to((n + lanes - 1) // lanes, sublanes * grid)
    padded = rows * lanes
    block_rows = rows // grid

    xf = x.reshape(-1)
    xf = jnp.pad(xf, (0, padded - n))  # zero pad; ReLU(0) == 0, sliced off below
    x2d = xf.reshape(rows, lanes)

    out2d = pl.pallas_call(
        _relu_kernel,
        out_shape=jax.ShapeDtypeStruct((rows, lanes), dtype),
        grid=(grid,),
        in_specs=[pl.BlockSpec((block_rows, lanes), lambda i: (i, 0))],
        out_specs=pl.BlockSpec((block_rows, lanes), lambda i: (i, 0)),
        # ReLU is in-place safe: reuse the input HBM buffer for the output.
        input_output_aliases={0: 0},
        compiler_params=pltpu.CompilerParams(
            dimension_semantics=("parallel",),
        ),
        cost_estimate=pl.CostEstimate(
            flops=n,
            transcendentals=0,
            bytes_accessed=2 * n * dtype.itemsize,
        ),
    )(x2d)

    return out2d.reshape(-1)[:n].reshape(orig_shape)


# jit so the pad / reshape / slice plumbing fuses with surrounding XLA ops.
relu_pallas_jit = jax.jit(relu_pallas)


if __name__ == "__main__":
    key = jax.random.PRNGKey(0)
    # Same shape as the reference module's input: torch.Size([1, 720, 14, 14])
    x = jax.random.normal(key, (1, 720, 14, 14), dtype=jnp.float32)

    y = relu_pallas_jit(x)
    jax.block_until_ready(y)

    # Sanity check against the plain-JAX reference.
    y_ref = jnp.maximum(x, 0.0)
    assert y.shape == x.shape and y.dtype == x.dtype
    assert bool(jnp.array_equal(y, y_ref))

    print("KERNEL_OK")
</pallas_src>

<mosaic_0001>
module attributes {stable_mosaic.version = 11 : i64} {
  func.func @_relu_kernel(%arg0: i32, %arg1: memref<280x128xf32, #tpu.memory_space<vmem>>, %arg2: memref<280x128xf32, #tpu.memory_space<vmem>>) attributes {dimension_semantics = [#tpu.dimension_semantics<parallel>], iteration_bounds = array<i64: 4>, scalar_prefetch = 0 : i64, scratch_operands = 0 : i64, tpu.core_type = #tpu.core_type<tc>, window_params = [{transform_indices = @transform_0, window_bounds = array<i64: 280, 128>}, {transform_indices = @transform_1, window_bounds = array<i64: 280, 128>}]} {
    %c0 = arith.constant 0 : index
    %c0_0 = arith.constant 0 : index
    %0 = vector.load %arg1[%c0, %c0_0] : memref<280x128xf32, #tpu.memory_space<vmem>>, vector<280x128xf32>
    %cst = arith.constant 0.000000e+00 : f32
    %1 = vector.broadcast %cst : f32 to vector<280x128xf32>
    %2 = arith.maximumf %0, %1 : vector<280x128xf32>
    %c0_1 = arith.constant 0 : index
    %c0_2 = arith.constant 0 : index
    %3 = vector.load %arg2[%c0_1, %c0_2] : memref<280x128xf32, #tpu.memory_space<vmem>>, vector<280x128xf32>
    tpu.vector_store %arg2[%c0_1, %c0_2], %2 {strides = array<i32>} : memref<280x128xf32, #tpu.memory_space<vmem>>, vector<280x128xf32>,
    return
  }
  func.func @transform_0(%arg0: i32) -> (i32, i32) {
    %c0_i32 = arith.constant 0 : i32
    %c0_i32_0 = arith.constant 0 : i32
    return %arg0, %c0_i32 : i32, i32
  }
  func.func @transform_1(%arg0: i32) -> (i32, i32) {
    %c0_i32 = arith.constant 0 : i32
    %c0_i32_0 = arith.constant 0 : i32
    return %arg0, %c0_i32 : i32, i32
  }
}

</mosaic_0001>

<llo_original>
// kernel: relu_pallas.1
$region0: #{relu_pallas.1}
  #allocation0 [shape = 'u32[]', space=smem, size = 0x4, offset = 0x4, fixed_abs, tag = 'smem constant byte address 0x4 - core index']
  #allocation1 [shape = 'u32[72,128]{1,0:T(1,128)}', space=vmem, size = 0x9000, scoped, tag = 'internal scratch']
  %s0 = inlined_call_operand.vmem [shape: f32[1120,128], index: 0, kind: input, shape index: {}, may-alias: {0,1}]
  %s1 = inlined_call_operand.vmem [shape: f32[1120,128], index: 1, kind: output, shape index: {}, may-alias: {0,1}]
  %s2 = sld [smem:[#allocation0]]
  $region37: #{relu_pallas.1} parent=0
    _
  %s4 = ssub.s32 1, %s2
  %s5 = scalar_select 0, %s4, %s2
  loop: start=0, step=1, limit=6
  $region2: #{relu_pallas.1} parent=0 // loop_pre_header
    _
  $region3: #{relu_pallas.1} parent=0 // loop_header
    %s7 = sphi 0, %s11
    %p8 = scmp.ge.s32.totalorder %s7, 6
    %s17 = sphi 0, %s19
    %s20 = sphi 0, %s17
    %s21 = sphi 0, %s20
    %s37 = sphi 0, %s21
    %s43 = sphi 0, %s45
    %s46 = sphi 0, %s43
    %s47 = sphi 0, %s46
    %s63 = sphi 0, %s47
  $region4: #{relu_pallas.1} parent=0 // loop_header_branch
    %10 = sbr.rel (%p8) target = $region8
  $region5: #{relu_pallas.1} parent=0 // loop_body
    %s12 = ssub.s32 %s7, 1
    %s13 = ssub.s32 %s7, 2
    %s14 = sadd.s32 %s7, 1
    %s15 = ssub.s32 %s7, %s14
    %p16 = scmp.eq.s32.totalorder %s15, 0
    %s18 = sadd.s32 %s17, 1
    %s19 = scalar_select %p16, %s17, %s18
    %p22 = pneg %p16
    %p23 = scmp.eq.s32.totalorder %s7, 3
    %p24 = por %p22, %p23
    %p25 = scmp.ne.s32.totalorder %s17, %s20
    %p26 = scmp.eq.s32.totalorder %s7, 0
    %p27 = por %p25, %p26
    %p28 = scmp.ne.s32.totalorder %s17, %s20
    %p29 = scmp.eq.s32.totalorder %s12, 3
    %p30 = por %p28, %p29
    %p31 = scmp.ne.s32.totalorder %s20, %s21
    %p32 = scmp.eq.s32.totalorder %s12, 0
    %p33 = por %p31, %p32
    %p34 = scmp.ne.s32.totalorder %s20, %s21
    %p35 = scmp.eq.s32.totalorder %s13, 3
    %p36 = por %p34, %p35
    %p38 = scmp.ne.s32.totalorder %s21, %s37
    %p39 = scmp.eq.s32.totalorder %s13, 0
    %p40 = por %p38, %p39
    %s41 = ssub.s32 %s7, %s14
    %p42 = scmp.eq.s32.totalorder %s41, 0
    %s44 = sadd.s32 %s43, 1
    %s45 = scalar_select %p42, %s43, %s44
    %p48 = pneg %p42
    %p49 = scmp.eq.s32.totalorder %s7, 3
    %p50 = por %p48, %p49
    %p51 = scmp.ne.s32.totalorder %s43, %s46
    %p52 = scmp.eq.s32.totalorder %s7, 0
    %p53 = por %p51, %p52
    %p54 = scmp.ne.s32.totalorder %s43, %s46
    %p55 = scmp.eq.s32.totalorder %s12, 3
    %p56 = por %p54, %p55
    %p57 = scmp.ne.s32.totalorder %s46, %s47
    %p58 = scmp.eq.s32.totalorder %s12, 0
    %p59 = por %p57, %p58
    %p60 = scmp.ne.s32.totalorder %s46, %s47
    %p61 = scmp.eq.s32.totalorder %s13, 3
    %p62 = por %p60, %p61
    %p64 = scmp.ne.s32.totalorder %s47, %s63
    %p65 = scmp.eq.s32.totalorder %s13, 0
    %p66 = por %p64, %p65
    %p67 = scmp.le.s32.totalorder 1, %s7
    %p68 = scmp.lt.s32.totalorder %s7, 5
    %p69 = pnand %p67, %p68
    %p70 = pneg %p69
    // Predicated region
    $region9: #{relu_pallas.1} parent=5 // pred_check
      _
    $region10: #{relu_pallas.1} parent=5 // pred_check_branch
      %72 = sbr.rel (%p69) target = $region12
    $region11: #{relu_pallas.1} parent=5 // pred_region
      %s73 = ssub.s32 %s7, 1
    $region12: #{relu_pallas.1} parent=5 // pred_fallthru
      _
    %p74 = scmp.lt.s32.totalorder %s7, 4
    // Predicated region
    $region13: #{relu_pallas.1} parent=5 // pred_check
      %p75 = pneg %p74
    $region14: #{relu_pallas.1} parent=5 // pred_check_branch
      %77 = sbr.rel (%p75) target = $region16
    $region15: #{relu_pallas.1} parent=5 // pred_region
      // Predicated region
      $region17: #{relu_pallas.1} parent=15 // pred_check
        %p78 = pneg %p27
      $region18: #{relu_pallas.1} parent=15 // pred_check_branch
        %80 = sbr.rel (%p78) target = $region20
      $region19: #{relu_pallas.1} parent=15 // pred_region
        %s81 = smul.u32 35, %s7
        %p82 = scmp.lt.s32.totalorder %s81, 139
        %s83 = scalar_select %p82, %s81, 139
        %s84 = smul.addr %s83, 8
        %s85 = scalar_lea.vmem %s0, %s84
        %s86 = smul.u32 35, %s7
      $region20: #{relu_pallas.1} parent=15 // pred_fallthru
        _
    $region16: #{relu_pallas.1} parent=5 // pred_fallthru
      _
    %p87 = scmp.le.s32.totalorder 1, %s7
    %p88 = scmp.lt.s32.totalorder %s7, 5
    %p89 = pnand %p87, %p88
    %p90 = pneg %p89
    // Predicated region
    $region21: #{relu_pallas.1} parent=5 // pred_check
      _
    $region22: #{relu_pallas.1} parent=5 // pred_check_branch
      %92 = sbr.rel (%p89) target = $region24
    $region23: #{relu_pallas.1} parent=5 // pred_region
      %s93 = ssub.s32 %s7, 1
      %s94 = smul.u32 35, %s12
      %p95 = scmp.lt.s32.totalorder %s94, 139
      %s96 = scalar_select %p95, %s94, 139
      %s97 = smul.addr %s96, 8
      %s98 = scalar_lea.vmem %s0, %s97
      %p99 = pneg %p33
      %p100 = pneg %p30
      %p101 = pneg %p59
      %p102 = pneg %p56
      %s103 = smul.u32 35, %s12
      %p104 = scmp.lt.s32.totalorder %s103, 139
      %s105 = scalar_select %p104, %s103, 139
      %s106 = smul.addr %s105, 8
      %s107 = scalar_lea.vmem %s1, %s106
      %s108 = smul.u32 35, %s12
      %p109 = scmp.lt.s32.totalorder %s108, 139
      %s110 = scalar_select %p109, %s108, 139
      %s111 = smul.addr %s110, 8
      %s112 = scalar_lea.vmem %s0, %s111
      %s113 = smul.u32 35, %s12
      %s114 = smul.u32 35, %s12
      %p115 = scmp.lt.s32.totalorder %s114, 139
      %s116 = scalar_select %p115, %s114, 139
      %s117 = smul.addr %s116, 8
      %s118 = scalar_lea.vmem %s1, %s117
      %s119 = smul.u32 35, %s12
      %v120 = vld [vmem:[%s112] sm:$0xff]
      %v121 = vld [vmem:[%s112 + $0x8] sm:$0xff]
      %v122 = vld [vmem:[%s112 + $0x10] sm:$0xff]
      %v123 = vld [vmem:[%s112 + $0x18] sm:$0xff]
      %v124 = vld [vmem:[%s112 + $0x20] sm:$0xff]
      %v125 = vld [vmem:[%s112 + $0x28] sm:$0xff]
      %v126 = vld [vmem:[%s112 + $0x30] sm:$0xff]
      %v127 = vld [vmem:[%s112 + $0x38] sm:$0xff]
      %v128 = vld [vmem:[%s112 + $0x40] sm:$0xff]
      %v129 = vld [vmem:[%s112 + $0x48] sm:$0xff]
      %v130 = vld [vmem:[%s112 + $0x50] sm:$0xff]
      %v131 = vld [vmem:[%s112 + $0x58] sm:$0xff]
      %v132 = vld [vmem:[%s112 + $0x60] sm:$0xff]
      %v133 = vld [vmem:[%s112 + $0x68] sm:$0xff]
      %v134 = vld [vmem:[%s112 + $0x70] sm:$0xff]
      %v135 = vld [vmem:[%s112 + $0x78] sm:$0xff]
      %v136 = vld [vmem:[%s112 + $0x80] sm:$0xff]
      %v137 = vld [vmem:[%s112 + $0x88] sm:$0xff]
      %v138 = vld [vmem:[%s112 + $0x90] sm:$0xff]
      %v139 = vld [vmem:[%s112 + $0x98] sm:$0xff]
      %v140 = vld [vmem:[%s112 + $0xa0] sm:$0xff]
      %v141 = vld [vmem:[%s112 + $0xa8] sm:$0xff]
      %v142 = vld [vmem:[%s112 + $0xb0] sm:$0xff]
      %v143 = vld [vmem:[%s112 + $0xb8] sm:$0xff]
      %v144 = vld [vmem:[%s112 + $0xc0] sm:$0xff]
      %v145 = vld [vmem:[%s112 + $0xc8] sm:$0xff]
      %v146 = vld [vmem:[%s112 + $0xd0] sm:$0xff]
      %v147 = vld [vmem:[%s112 + $0xd8] sm:$0xff]
      %v148 = vld [vmem:[%s112 + $0xe0] sm:$0xff]
      %v149 = vld [vmem:[%s112 + $0xe8] sm:$0xff]
      %v150 = vld [vmem:[%s112 + $0xf0] sm:$0xff]
      %v151 = vld [vmem:[%s112 + $0xf8] sm:$0xff]
      %v152 = vld [vmem:[%s112 + $0x100] sm:$0xff]
      %v153 = vld [vmem:[%s112 + $0x108] sm:$0xff]
      %v154 = vld [vmem:[%s112 + $0x110] sm:$0xff]
      %v155 = vmax.f32 %v120, 0.0
      %v156 = vmax.f32 %v121, 0.0
      %v157 = vmax.f32 %v122, 0.0
      %v158 = vmax.f32 %v123, 0.0
      %v159 = vmax.f32 %v124, 0.0
      %v160 = vmax.f32 %v125, 0.0
      %v161 = vmax.f32 %v126, 0.0
      %v162 = vmax.f32 %v127, 0.0
      %v163 = vmax.f32 %v128, 0.0
      %v164 = vmax.f32 %v129, 0.0
      %v165 = vmax.f32 %v130, 0.0
      %v166 = vmax.f32 %v131, 0.0
      %v167 = vmax.f32 %v132, 0.0
      %v168 = vmax.f32 %v133, 0.0
      %v169 = vmax.f32 %v134, 0.0
      %v170 = vmax.f32 %v135, 0.0
      %v171 = vmax.f32 %v136, 0.0
      %v172 = vmax.f32 %v137, 0.0
      %v173 = vmax.f32 %v138, 0.0
      %v174 = vmax.f32 %v139, 0.0
      %v175 = vmax.f32 %v140, 0.0
      %v176 = vmax.f32 %v141, 0.0
      %v177 = vmax.f32 %v142, 0.0
      %v178 = vmax.f32 %v143, 0.0
      %v179 = vmax.f32 %v144, 0.0
      %v180 = vmax.f32 %v145, 0.0
      %v181 = vmax.f32 %v146, 0.0
      %v182 = vmax.f32 %v147, 0.0
      %v183 = vmax.f32 %v148, 0.0
      %v184 = vmax.f32 %v149, 0.0
      %v185 = vmax.f32 %v150, 0.0
      %v186 = vmax.f32 %v151, 0.0
      %v187 = vmax.f32 %v152, 0.0
      %v188 = vmax.f32 %v153, 0.0
      %v189 = vmax.f32 %v154, 0.0
      %190 = vst [vmem:[%s118] sm:$0xff] %v155
      %191 = vst [vmem:[%s118 + $0x8] sm:$0xff] %v156
      %192 = vst [vmem:[%s118 + $0x10] sm:$0xff] %v157
      %193 = vst [vmem:[%s118 + $0x18] sm:$0xff] %v158
      %194 = vst [vmem:[%s118 + $0x20] sm:$0xff] %v159
      %195 = vst [vmem:[%s118 + $0x28] sm:$0xff] %v160
      %196 = vst [vmem:[%s118 + $0x30] sm:$0xff] %v161
      %197 = vst [vmem:[%s118 + $0x38] sm:$0xff] %v162
      %198 = vst [vmem:[%s118 + $0x40] sm:$0xff] %v163
      %199 = vst [vmem:[%s118 + $0x48] sm:$0xff] %v164
      %200 = vst [vmem:[%s118 + $0x50] sm:$0xff] %v165
      %201 = vst [vmem:[%s118 + $0x58] sm:$0xff] %v166
      %202 = vst [vmem:[%s118 + $0x60] sm:$0xff] %v167
      %203 = vst [vmem:[%s118 + $0x68] sm:$0xff] %v168
      %204 = vst [vmem:[%s118 + $0x70] sm:$0xff] %v169
      %205 = vst [vmem:[%s118 + $0x78] sm:$0xff] %v170
      %206 = vst [vmem:[%s118 + $0x80] sm:$0xff] %v171
      %207 = vst [vmem:[%s118 + $0x88] sm:$0xff] %v172
      %208 = vst [vmem:[%s118 + $0x90] sm:$0xff] %v173
      %209 = vst [vmem:[%s118 + $0x98] sm:$0xff] %v174
      %210 = vst [vmem:[%s118 + $0xa0] sm:$0xff] %v175
      %211 = vst [vmem:[%s118 + $0xa8] sm:$0xff] %v176
      %212 = vst [vmem:[%s118 + $0xb0] sm:$0xff] %v177
      %213 = vst [vmem:[%s118 + $0xb8] sm:$0xff] %v178
      %214 = vst [vmem:[%s118 + $0xc0] sm:$0xff] %v179
      %215 = vst [vmem:[%s118 + $0xc8] sm:$0xff] %v180
      %216 = vst [vmem:[%s118 + $0xd0] sm:$0xff] %v181
      %217 = vst [vmem:[%s118 + $0xd8] sm:$0xff] %v182
      %218 = vst [vmem:[%s118 + $0xe0] sm:$0xff] %v183
      %219 = vst [vmem:[%s118 + $0xe8] sm:$0xff] %v184
      %220 = vst [vmem:[%s118 + $0xf0] sm:$0xff] %v185
      %221 = vst [vmem:[%s118 + $0xf8] sm:$0xff] %v186
      %222 = vst [vmem:[%s118 + $0x100] sm:$0xff] %v187
      %223 = vst [vmem:[%s118 + $0x108] sm:$0xff] %v188
      %224 = vst [vmem:[%s118 + $0x110] sm:$0xff] %v189
      %s225 = smul.u32 35, %s12
      %p226 = scmp.lt.s32.totalorder %s225, 139
      %s227 = scalar_select %p226, %s225, 139
      %s228 = smul.addr %s227, 8
      %s229 = scalar_lea.vmem %s1, %s228
      // Predicated region
      $region25: #{relu_pallas.1} parent=23 // pred_check
        %p230 = pneg %p56
      $region26: #{relu_pallas.1} parent=23 // pred_check_branch
        %232 = sbr.rel (%p230) target = $region28
      $region27: #{relu_pallas.1} parent=23 // pred_region
        %s233 = smul.u32 35, %s12
      $region28: #{relu_pallas.1} parent=23 // pred_fallthru
        _
    $region24: #{relu_pallas.1} parent=5 // pred_fallthru
      _
    %p234 = scmp.le.s32.totalorder 2, %s7
    // Predicated region
    $region29: #{relu_pallas.1} parent=5 // pred_check
      %p235 = pneg %p234
    $region30: #{relu_pallas.1} parent=5 // pred_check_branch
      %237 = sbr.rel (%p235) target = $region32
    $region31: #{relu_pallas.1} parent=5 // pred_region
      %s238 = ssub.s32 %s7, 2
      // Predicated region
      $region33: #{relu_pallas.1} parent=31 // pred_check
        %p239 = pneg %p62
      $region34: #{relu_pallas.1} parent=31 // pred_check_branch
        %241 = sbr.rel (%p239) target = $region36
      $region35: #{relu_pallas.1} parent=31 // pred_region
        %s242 = smul.u32 35, %s13
        %p243 = scmp.lt.s32.totalorder %s242, 139
        %s244 = scalar_select %p243, %s242, 139
        %s245 = smul.addr %s244, 8
        %s246 = scalar_lea.vmem %s1, %s245
      $region36: #{relu_pallas.1} parent=31 // pred_fallthru
        _
    $region32: #{relu_pallas.1} parent=5 // pred_fallthru
      _
  $region6: #{relu_pallas.1} parent=0 // loop_footer
    %s11 = sadd.s32 1, %s7
  $region7: #{relu_pallas.1} parent=0 // loop_footer_branch
    %6 = sbr.rel target = $region3
  $region8: #{relu_pallas.1} parent=0 // loop_exit
    _

</llo_original>
